<compile_context>
chip_gen: v5e
topology: v5e:2x2
jax: 0.10.0
libtpu: 0.0.40
codegen_flags: <defaults>
</compile_context>

<pallas_src>
import jax
import jax.numpy as jnp
from jax import lax
from jax.experimental import pallas as pl
from jax.experimental.pallas import tpu as pltpu

_LANE = 128


def _round_up(x, m):
    return (x + m - 1) // m * m


# ---------------------------------------------------------------------------
# Fused kernel: rel_coor + CoorNorm + masked attention einsum + normalization
# ---------------------------------------------------------------------------
def _coor_out_kernel(coor_i_ref, coor_jt_ref, att_ref, mask_ref, flex_ref,
                     out_ref):
    # Block shapes:
    #   coor_i  (1, ti, 3)   -- coordinates of the i rows in this tile
    #   coor_jt (1, 3,  N)   -- all j coordinates, coordinate-major (lane-dense)
    #   att     (1, ti, N)   -- raw coor_att (pre edge-mask)
    #   mask    (1, ti, N)   -- edge_mask_after_sampling
    #   flex    (1, ti, 1)   -- flex_coor_mask_after_sampling
    #   out     (1, ti, 3)
    ci = coor_i_ref[0].astype(jnp.float32)      # (ti, 3)
    cjt = coor_jt_ref[0].astype(jnp.float32)    # (3, N)
    att = att_ref[0].astype(jnp.float32)        # (ti, N)
    msk = mask_ref[0].astype(jnp.float32)       # (ti, N)
    flex = flex_ref[0].astype(jnp.float32)      # (ti, 1)

    # Relative coordinates per component, lane-dense along j.
    rel0 = ci[:, 0:1] - cjt[0:1, :]             # (ti, N)
    rel1 = ci[:, 1:2] - cjt[1:2, :]
    rel2 = ci[:, 2:3] - cjt[2:3, :]

    # CoorNorm: 1 / max(||rel||, 1e-8), with the reference's "zero row -> /1e8"
    # branch. rsqrt(0)=inf, clamped to 1e8; zero rows then give 0 * 1e8 == 0,
    # matching the reference exactly.
    sq = rel0 * rel0 + rel1 * rel1 + rel2 * rel2
    inv = jnp.minimum(lax.rsqrt(sq), jnp.float32(1e8))

    # Masked attention weights fused with the inverse norm.
    w = att * msk * inv                         # (ti, N)

    # Per-row neighbor count (denominator) fused with the mask read.
    denom = jnp.sum(msk, axis=-1, keepdims=True) + jnp.float32(1e-7)  # (ti, 1)

    # einsum('bij,bijc->bic') as three lane reductions (XLU).
    o0 = jnp.sum(w * rel0, axis=-1, keepdims=True)
    o1 = jnp.sum(w * rel1, axis=-1, keepdims=True)
    o2 = jnp.sum(w * rel2, axis=-1, keepdims=True)
    out = jnp.concatenate([o0, o1, o2], axis=-1)          # (ti, 3)
    out = out / denom * flex
    out_ref[0] = out.astype(out_ref.dtype)


def se3_coor_out(coor, coor_att, edge_mask, flex_coor_mask, *, tile_i=256):
    """Fused coordinate-update branch of SE3EquivariantAttention.

    coor:           (B, N, 3)
    coor_att:       (B, N, N)   raw coor_out MLP output (squeezed), pre-mask
    edge_mask:      (B, N, N)
    flex_coor_mask: (B, N)
    returns coor_out: (B, N, 3)
    """
    b, n, d = coor.shape
    assert d == 3, "coordinates must be 3-dimensional"

    # i-tile: multiple of 8 sublanes, ragged last block handled by cdiv grid.
    ti = max(8, min(_round_up(tile_i, 8), _round_up(n, 8)))
    grid = (b, pl.cdiv(n, ti))

    # Tiny (B,3,N) transposed copy of the coordinates so the j-axis is
    # lane-dense inside the kernel; negligible HBM traffic.
    coor_t = jnp.transpose(coor, (0, 2, 1))
    flex3 = flex_coor_mask.reshape(b, n, 1)
    if not jnp.issubdtype(edge_mask.dtype, jnp.floating):
        edge_mask = edge_mask.astype(jnp.float32)
    if not jnp.issubdtype(flex3.dtype, jnp.floating):
        flex3 = flex3.astype(jnp.float32)

    return pl.pallas_call(
        _coor_out_kernel,
        out_shape=jax.ShapeDtypeStruct((b, n, 3), coor.dtype),
        grid_spec=pltpu.PrefetchScalarGridSpec(
            num_scalar_prefetch=0,
            grid=grid,
            in_specs=[
                pl.BlockSpec((1, ti, 3), lambda bb, ii: (bb, ii, 0)),  # coor (i)
                pl.BlockSpec((1, 3, n), lambda bb, ii: (bb, 0, 0)),    # coor^T (j)
                pl.BlockSpec((1, ti, n), lambda bb, ii: (bb, ii, 0)),  # coor_att
                pl.BlockSpec((1, ti, n), lambda bb, ii: (bb, ii, 0)),  # edge_mask
                pl.BlockSpec((1, ti, 1), lambda bb, ii: (bb, ii, 0)),  # flex mask
            ],
            out_specs=pl.BlockSpec((1, ti, 3), lambda bb, ii: (bb, ii, 0)),
        ),
        compiler_params=pltpu.CompilerParams(
            dimension_semantics=("parallel", "parallel"),
        ),
    )(coor, coor_t, coor_att, edge_mask, flex3)


# ---------------------------------------------------------------------------
# Standalone CoorNorm (module boundary kept; use the fused kernel when the
# consumer is the attention einsum).
# ---------------------------------------------------------------------------
def _coor_norm_kernel(x_ref, o_ref):
    v = x_ref[...].astype(jnp.float32)                     # (3, tile), lane-dense
    # Squared L2 norm across the 3 sublane rows -> (1, tile): one full-width
    # VPU multiply + XLU sublane reduce (no unrolled 1/8-occupancy slices).
    sq = jnp.sum(v * v, axis=0, keepdims=True)
    # 1 / max(||x||, 1e-8) with the zero-row branch folded in: rsqrt(0)=inf is
    # clamped to 1e8 and multiplying the exactly-zero row by 1e8 still gives 0.
    inv = jnp.minimum(lax.rsqrt(sq), jnp.float32(1e8))
    o_ref[...] = (v * inv).astype(o_ref.dtype)


def coor_norm(rel_coor, *, tile_l=131072):
    """CoorNorm via Pallas. rel_coor: (..., 3) float array."""
    orig_shape = rel_coor.shape
    d = orig_shape[-1]
    m = 1
    for s in orig_shape[:-1]:
        m *= s

    # Lane-dense (3, M) slab.  (If the producer can emit this layout directly,
    # or if the consumer is the attention einsum, prefer se3_coor_out above —
    # the transpose here is an extra HBM pass.)
    x = jnp.transpose(rel_coor.reshape(m, d), (1, 0))

    # Tile: multiple of 128 lanes.  Ragged last block handled by the cdiv grid
    # (no jnp.pad copy): overhang reads are garbage but purely per-lane, and
    # overhang writes are masked.
    tile = max(_LANE, min(_round_up(tile_l, _LANE), _round_up(m, _LANE)))
    grid = (pl.cdiv(m, tile),)

    out = pl.pallas_call(
        _coor_norm_kernel,
        out_shape=jax.ShapeDtypeStruct((d, m), rel_coor.dtype),
        grid_spec=pltpu.PrefetchScalarGridSpec(
            num_scalar_prefetch=0,
            grid=grid,
            in_specs=[pl.BlockSpec((d, tile), lambda i: (0, i))],
            out_specs=pl.BlockSpec((d, tile), lambda i: (0, i)),
        ),
        compiler_params=pltpu.CompilerParams(
            dimension_semantics=("parallel",),
            # tile=131072 -> 4 MiB per buffer (3 rows padded to 8 sublanes),
            # ~16 MiB with in+out double buffering; raise the scoped limit so
            # v5e's 16 MiB default does not trip.
            vmem_limit_bytes=32 * 1024 * 1024,
        ),
    )(x)

    return jnp.transpose(out, (1, 0)).reshape(orig_shape)


# ---------------------------------------------------------------------------
# Pure-JAX references
# ---------------------------------------------------------------------------
def _coor_norm_ref(rel_coor):
    norm = jnp.linalg.norm(rel_coor, axis=-1, keepdims=True)
    norm = jnp.where(norm == 0.0, norm + 1.0e8, norm)
    return rel_coor / jnp.maximum(norm, 1.0e-8)


def _coor_out_ref(coor, coor_att, edge_mask, flex_coor_mask):
    rel = coor[:, :, None, :] - coor[:, None, :, :]
    normed = _coor_norm_ref(rel)
    att = coor_att * edge_mask
    out = jnp.einsum("bij,bijc->bic", att, normed)
    out = out / (jnp.sum(edge_mask, axis=-1, keepdims=True) + 1e-7)
    return out * flex_coor_mask[:, :, None]


if __name__ == "__main__":
    key = jax.random.PRNGKey(0)
    k1, k2, k3, k4 = jax.random.split(key, 4)

    # --- Fused coordinate-branch kernel, small attention-like shapes -------
    B, N = 2, 8
    coor = jax.random.normal(k1, (B, N, 3), dtype=jnp.float32)
    coor_att = jax.random.normal(k2, (B, N, N), dtype=jnp.float32)
    edge_mask = (jax.random.uniform(k3, (B, N, N)) > 0.3).astype(jnp.float32)
    flex_mask = (jax.random.uniform(k4, (B, N)) > 0.5).astype(jnp.float32)

    out = se3_coor_out(coor, coor_att, edge_mask, flex_mask)
    out = jax.block_until_ready(out)
    ref = _coor_out_ref(coor, coor_att, edge_mask, flex_mask)
    assert out.shape == (B, N, 3)
    assert jnp.allclose(out, ref, atol=1e-5, rtol=1e-5), "fused coor_out mismatch"

    # Same kernel with a multi-block i grid (exercises the (B, cdiv(N, ti)) grid).
    B2, N2 = 1, 16
    coor2 = jax.random.normal(k2, (B2, N2, 3), dtype=jnp.float32)
    att2 = jax.random.normal(k3, (B2, N2, N2), dtype=jnp.float32)
    mask2 = (jax.random.uniform(k1, (B2, N2, N2)) > 0.3).astype(jnp.float32)
    flex2 = (jax.random.uniform(k4, (B2, N2)) > 0.5).astype(jnp.float32)
    out2 = jax.block_until_ready(se3_coor_out(coor2, att2, mask2, flex2, tile_i=8))
    ref2 = _coor_out_ref(coor2, att2, mask2, flex2)
    assert jnp.allclose(out2, ref2, atol=1e-5, rtol=1e-5), "fused coor_out mismatch (tiled)"

    # --- Standalone CoorNorm: ragged row count + multi-block ragged grid ---
    Bc, Nc1, Nc2 = 2, 17, 19          # M = 646, not a multiple of 128
    rel = jax.random.normal(k3, (Bc, Nc1, Nc2, 3), dtype=jnp.float32)
    idx = jnp.arange(min(Nc1, Nc2))
    rel = rel.at[:, idx, idx, :].set(0.0)   # exercise the norm == 0 branch
    outn = jax.block_until_ready(coor_norm(rel, tile_l=256))  # 3 blocks, ragged last
    refn = _coor_norm_ref(rel)
    assert outn.shape == rel.shape
    assert jnp.allclose(outn, refn, atol=1e-5, rtol=1e-5), "coor_norm mismatch"

    print("KERNEL_OK")
</pallas_src>

<mosaic_0001>
module attributes {stable_mosaic.version = 11 : i64} {
  func.func @_coor_out_kernel(%arg0: i32, %arg1: i32, %arg2: memref<1x8x3xf32, #tpu.memory_space<vmem>>, %arg3: memref<1x3x8xf32, #tpu.memory_space<vmem>>, %arg4: memref<1x8x8xf32, #tpu.memory_space<vmem>>, %arg5: memref<1x8x8xf32, #tpu.memory_space<vmem>>, %arg6: memref<1x8x1xf32, #tpu.memory_space<vmem>>, %arg7: memref<1x8x3xf32, #tpu.memory_space<vmem>>) attributes {dimension_semantics = [#tpu.dimension_semantics<parallel>, #tpu.dimension_semantics<parallel>], iteration_bounds = array<i64: 2, 1>, scalar_prefetch = 0 : i64, scratch_operands = 0 : i64, tpu.core_type = #tpu.core_type<tc>, window_params = [{transform_indices = @transform_0, window_bounds = array<i64: 1, 8, 3>}, {transform_indices = @transform_1, window_bounds = array<i64: 1, 3, 8>}, {transform_indices = @transform_2, window_bounds = array<i64: 1, 8, 8>}, {transform_indices = @transform_3, window_bounds = array<i64: 1, 8, 8>}, {transform_indices = @transform_4, window_bounds = array<i64: 1, 8, 1>}, {transform_indices = @transform_5, window_bounds = array<i64: 1, 8, 3>}]} {
    %c0 = arith.constant 0 : index
    %c0_0 = arith.constant 0 : index
    %c0_1 = arith.constant 0 : index
    %0 = vector.load %arg2[%c0, %c0_0, %c0_1] : memref<1x8x3xf32, #tpu.memory_space<vmem>>, vector<1x8x3xf32>
    %1 = vector.shape_cast %0 : vector<1x8x3xf32> to vector<8x3xf32>
    %c0_2 = arith.constant 0 : index
    %c0_3 = arith.constant 0 : index
    %c0_4 = arith.constant 0 : index
    %2 = vector.load %arg3[%c0_2, %c0_3, %c0_4] : memref<1x3x8xf32, #tpu.memory_space<vmem>>, vector<1x3x8xf32>
    %3 = vector.shape_cast %2 : vector<1x3x8xf32> to vector<3x8xf32>
    %c0_5 = arith.constant 0 : index
    %c0_6 = arith.constant 0 : index
    %c0_7 = arith.constant 0 : index
    %4 = vector.load %arg4[%c0_5, %c0_6, %c0_7] : memref<1x8x8xf32, #tpu.memory_space<vmem>>, vector<1x8x8xf32>
    %5 = vector.shape_cast %4 : vector<1x8x8xf32> to vector<8x8xf32>
    %c0_8 = arith.constant 0 : index
    %c0_9 = arith.constant 0 : index
    %c0_10 = arith.constant 0 : index
    %6 = vector.load %arg5[%c0_8, %c0_9, %c0_10] : memref<1x8x8xf32, #tpu.memory_space<vmem>>, vector<1x8x8xf32>
    %7 = vector.shape_cast %6 : vector<1x8x8xf32> to vector<8x8xf32>
    %c0_11 = arith.constant 0 : index
    %c0_12 = arith.constant 0 : index
    %c0_13 = arith.constant 0 : index
    %8 = vector.load %arg6[%c0_11, %c0_12, %c0_13] : memref<1x8x1xf32, #tpu.memory_space<vmem>>, vector<1x8x1xf32>
    %9 = vector.shape_cast %8 : vector<1x8x1xf32> to vector<8x1xf32>
    %10 = vector.extract_strided_slice %1 {offsets = [0, 0], sizes = [8, 1], strides = [1, 1]} : vector<8x3xf32> to vector<8x1xf32>
    %11 = vector.extract_strided_slice %3 {offsets = [0, 0], sizes = [1, 8], strides = [1, 1]} : vector<3x8xf32> to vector<1x8xf32>
    %12 = vector.broadcast %10 : vector<8x1xf32> to vector<8x8xf32>
    %13 = vector.broadcast %11 : vector<1x8xf32> to vector<8x8xf32>
    %14 = arith.subf %12, %13 : vector<8x8xf32>
    %15 = vector.extract_strided_slice %1 {offsets = [0, 1], sizes = [8, 1], strides = [1, 1]} : vector<8x3xf32> to vector<8x1xf32>
    %16 = vector.extract_strided_slice %3 {offsets = [1, 0], sizes = [1, 8], strides = [1, 1]} : vector<3x8xf32> to vector<1x8xf32>
    %17 = vector.broadcast %15 : vector<8x1xf32> to vector<8x8xf32>
    %18 = vector.broadcast %16 : vector<1x8xf32> to vector<8x8xf32>
    %19 = arith.subf %17, %18 : vector<8x8xf32>
    %20 = vector.extract_strided_slice %1 {offsets = [0, 2], sizes = [8, 1], strides = [1, 1]} : vector<8x3xf32> to vector<8x1xf32>
    %21 = vector.extract_strided_slice %3 {offsets = [2, 0], sizes = [1, 8], strides = [1, 1]} : vector<3x8xf32> to vector<1x8xf32>
    %22 = vector.broadcast %20 : vector<8x1xf32> to vector<8x8xf32>
    %23 = vector.broadcast %21 : vector<1x8xf32> to vector<8x8xf32>
    %24 = arith.subf %22, %23 : vector<8x8xf32>
    %25 = arith.mulf %14, %14 : vector<8x8xf32>
    %26 = arith.mulf %19, %19 : vector<8x8xf32>
    %27 = arith.addf %25, %26 : vector<8x8xf32>
    %28 = arith.mulf %24, %24 : vector<8x8xf32>
    %29 = arith.addf %27, %28 : vector<8x8xf32>
    %30 = math.rsqrt %29 : vector<8x8xf32>
    %cst = arith.constant 1.000000e+08 : f32
    %31 = vector.broadcast %cst : f32 to vector<8x8xf32>
    %32 = arith.minimumf %30, %31 : vector<8x8xf32>
    %33 = arith.mulf %5, %7 : vector<8x8xf32>
    %34 = arith.mulf %33, %32 : vector<8x8xf32>
    %cst_14 = arith.constant dense<0.000000e+00> : vector<8xf32>
    %35 = vector.multi_reduction <add>, %7, %cst_14 [1] : vector<8x8xf32> to vector<8xf32>
    %36 = vector.shape_cast %35 : vector<8xf32> to vector<8x1xf32>
    %cst_15 = arith.constant 1.000000e-07 : f32
    %37 = vector.broadcast %cst_15 : f32 to vector<8x1xf32>
    %38 = arith.addf %36, %37 : vector<8x1xf32>
    %39 = arith.mulf %34, %14 : vector<8x8xf32>
    %cst_16 = arith.constant dense<0.000000e+00> : vector<8xf32>
    %40 = vector.multi_reduction <add>, %39, %cst_16 [1] : vector<8x8xf32> to vector<8xf32>
    %41 = vector.shape_cast %40 : vector<8xf32> to vector<8x1xf32>
    %42 = arith.mulf %34, %19 : vector<8x8xf32>
    %cst_17 = arith.constant dense<0.000000e+00> : vector<8xf32>
    %43 = vector.multi_reduction <add>, %42, %cst_17 [1] : vector<8x8xf32> to vector<8xf32>
    %44 = vector.shape_cast %43 : vector<8xf32> to vector<8x1xf32>
    %45 = arith.mulf %34, %24 : vector<8x8xf32>
    %cst_18 = arith.constant dense<0.000000e+00> : vector<8xf32>
    %46 = vector.multi_reduction <add>, %45, %cst_18 [1] : vector<8x8xf32> to vector<8xf32>
    %47 = vector.shape_cast %46 : vector<8xf32> to vector<8x1xf32>
    %48 = tpu.concatenate %41, %44, %47 in 1 : vector<8x1xf32>, vector<8x1xf32>, vector<8x1xf32> -> vector<8x3xf32>
    %49 = vector.broadcast %38 : vector<8x1xf32> to vector<8x3xf32>
    %50 = arith.divf %48, %49 : vector<8x3xf32>
    %51 = vector.broadcast %9 : vector<8x1xf32> to vector<8x3xf32>
    %52 = arith.mulf %50, %51 : vector<8x3xf32>
    %c0_19 = arith.constant 0 : index
    %c0_20 = arith.constant 0 : index
    %c0_21 = arith.constant 0 : index
    %53 = vector.load %arg7[%c0_19, %c0_20, %c0_21] : memref<1x8x3xf32, #tpu.memory_space<vmem>>, vector<1x8x3xf32>
    %54 = vector.shape_cast %53 : vector<1x8x3xf32> to vector<8x3xf32>
    %55 = vector.shape_cast %52 : vector<8x3xf32> to vector<1x8x3xf32>
    tpu.vector_store %arg7[%c0_19, %c0_20, %c0_21], %55 {strides = array<i32>} : memref<1x8x3xf32, #tpu.memory_space<vmem>>, vector<1x8x3xf32>,
    return
  }
  func.func @transform_0(%arg0: i32, %arg1: i32) -> (i32, i32, i32) {
    %c0_i32 = arith.constant 0 : i32
    %c0_i32_0 = arith.constant 0 : i32
    return %arg0, %arg1, %c0_i32 : i32, i32, i32
  }
  func.func @transform_1(%arg0: i32, %arg1: i32) -> (i32, i32, i32) {
    %c0_i32 = arith.constant 0 : i32
    %c0_i32_0 = arith.constant 0 : i32
    %c0_i32_1 = arith.constant 0 : i32
    return %arg0, %c0_i32, %c0_i32_0 : i32, i32, i32
  }
  func.func @transform_2(%arg0: i32, %arg1: i32) -> (i32, i32, i32) {
    %c0_i32 = arith.constant 0 : i32
    %c0_i32_0 = arith.constant 0 : i32
    return %arg0, %arg1, %c0_i32 : i32, i32, i32
  }
  func.func @transform_3(%arg0: i32, %arg1: i32) -> (i32, i32, i32) {
    %c0_i32 = arith.constant 0 : i32
    %c0_i32_0 = arith.constant 0 : i32
    return %arg0, %arg1, %c0_i32 : i32, i32, i32
  }
  func.func @transform_4(%arg0: i32, %arg1: i32) -> (i32, i32, i32) {
    %c0_i32 = arith.constant 0 : i32
    %c0_i32_0 = arith.constant 0 : i32
    return %arg0, %arg1, %c0_i32 : i32, i32, i32
  }
  func.func @transform_5(%arg0: i32, %arg1: i32) -> (i32, i32, i32) {
    %c0_i32 = arith.constant 0 : i32
    %c0_i32_0 = arith.constant 0 : i32
    return %arg0, %arg1, %c0_i32 : i32, i32, i32
  }
}

</mosaic_0001>

<llo_original>
// kernel: tpu_custom_call.1
$region0: #{tpu_custom_call.1}
  #allocation0 [shape = 'u32[]', space=smem, size = 0x4, offset = 0x4, fixed_abs, tag = 'smem constant byte address 0x4 - core index']
  #allocation1 [shape = 'u32[72,128]{1,0:T(1,128)}', space=vmem, size = 0x9000, scoped, tag = 'internal scratch']
  %s0 = inlined_call_operand.vmem [shape: f32[2,8,3], index: 0, kind: input, shape index: {}]
  %s1 = inlined_call_operand.vmem [shape: f32[2,3,8], index: 1, kind: input, shape index: {}]
  %s2 = inlined_call_operand.vmem [shape: f32[2,8,8], index: 2, kind: input, shape index: {}]
  %s3 = inlined_call_operand.vmem [shape: f32[2,8,8], index: 3, kind: input, shape index: {}]
  %s4 = inlined_call_operand.vmem [shape: f32[2,8,1], index: 4, kind: input, shape index: {}]
  %s5 = inlined_call_operand.vmem [shape: f32[2,8,3], index: 5, kind: output, shape index: {}]
  %s6 = sld [smem:[#allocation0]]
  $region53: #{tpu_custom_call.1} parent=0
    _
  %s8 = ssub.s32 1, %s6
  %s9 = scalar_select 0, %s8, %s6
  loop: start=0, step=1, limit=4
  $region2: #{tpu_custom_call.1} parent=0 // loop_pre_header
    _
  $region3: #{tpu_custom_call.1} parent=0 // loop_header
    %s11 = sphi 0, %s15
    %p12 = scmp.ge.s32.totalorder %s11, 4
    %s18 = sphi 0, %s30
    %s19 = sphi 0, %s26
    %s20 = sphi 0, %s18
    %s21 = sphi 0, %s19
    %s22 = sphi 0, %s20
    %s23 = sphi 0, %s21
    %s35 = sphi 0, %s37
    %s38 = sphi 0, %s35
    %s39 = sphi 0, %s38
    %s55 = sphi 0, %s39
    %s61 = sphi 0, %s63
    %s64 = sphi 0, %s61
    %s65 = sphi 0, %s64
    %s81 = sphi 0, %s65
    %s89 = sphi 0, %s91
    %s92 = sphi 0, %s89
    %s93 = sphi 0, %s92
    %s109 = sphi 0, %s93
    %s117 = sphi 0, %s119
    %s120 = sphi 0, %s117
    %s121 = sphi 0, %s120
    %s137 = sphi 0, %s121
    %s145 = sphi 0, %s147
    %s148 = sphi 0, %s145
    %s149 = sphi 0, %s148
    %s165 = sphi 0, %s149
    %s173 = sphi 0, %s175
    %s176 = sphi 0, %s173
    %s177 = sphi 0, %s176
    %s193 = sphi 0, %s177
  $region4: #{tpu_custom_call.1} parent=0 // loop_header_branch
    %14 = sbr.rel (%p12) target = $region8
  $region5: #{tpu_custom_call.1} parent=0 // loop_body
    %s16 = ssub.s32 %s11, 1
    %s17 = ssub.s32 %s11, 2
    %s24 = sadd.s32 1, %s19
    %p25 = scmp.ge.s32.totalorder %s24, 1
    %s26 = scalar_select %p25, 0, %s24
    %s27 = sadd.s32 1, %s18
    %s28 = scalar_select %p25, %s27, %s18
    %p29 = scmp.ge.s32.totalorder %s28, 2
    %s30 = scalar_select %p29, 0, %s28
    %s31 = ssub.s32 %s18, %s30
    %s32 = ssub.s32 %s19, %s26
    %s33 = sor.u32 %s31, %s32
    %p34 = scmp.eq.s32.totalorder %s33, 0
    %s36 = sadd.s32 %s35, 1
    %s37 = scalar_select %p34, %s35, %s36
    %p40 = pneg %p34
    %p41 = scmp.eq.s32.totalorder %s11, 1
    %p42 = por %p40, %p41
    %p43 = scmp.ne.s32.totalorder %s35, %s38
    %p44 = scmp.eq.s32.totalorder %s11, 0
    %p45 = por %p43, %p44
    %p46 = scmp.ne.s32.totalorder %s35, %s38
    %p47 = scmp.eq.s32.totalorder %s16, 1
    %p48 = por %p46, %p47
    %p49 = scmp.ne.s32.totalorder %s38, %s39
    %p50 = scmp.eq.s32.totalorder %s16, 0
    %p51 = por %p49, %p50
    %p52 = scmp.ne.s32.totalorder %s38, %s39
    %p53 = scmp.eq.s32.totalorder %s17, 1
    %p54 = por %p52, %p53
    %p56 = scmp.ne.s32.totalorder %s39, %s55
    %p57 = scmp.eq.s32.totalorder %s17, 0
    %p58 = por %p56, %p57
    %s59 = ssub.s32 %s18, %s30
    %p60 = scmp.eq.s32.totalorder %s59, 0
    %s62 = sadd.s32 %s61, 1
    %s63 = scalar_select %p60, %s61, %s62
    %p66 = pneg %p60
    %p67 = scmp.eq.s32.totalorder %s11, 1
    %p68 = por %p66, %p67
    %p69 = scmp.ne.s32.totalorder %s61, %s64
    %p70 = scmp.eq.s32.totalorder %s11, 0
    %p71 = por %p69, %p70
    %p72 = scmp.ne.s32.totalorder %s61, %s64
    %p73 = scmp.eq.s32.totalorder %s16, 1
    %p74 = por %p72, %p73
    %p75 = scmp.ne.s32.totalorder %s64, %s65
    %p76 = scmp.eq.s32.totalorder %s16, 0
    %p77 = por %p75, %p76
    %p78 = scmp.ne.s32.totalorder %s64, %s65
    %p79 = scmp.eq.s32.totalorder %s17, 1
    %p80 = por %p78, %p79
    %p82 = scmp.ne.s32.totalorder %s65, %s81
    %p83 = scmp.eq.s32.totalorder %s17, 0
    %p84 = por %p82, %p83
    %s85 = ssub.s32 %s18, %s30
    %s86 = ssub.s32 %s19, %s26
    %s87 = sor.u32 %s85, %s86
    %p88 = scmp.eq.s32.totalorder %s87, 0
    %s90 = sadd.s32 %s89, 1
    %s91 = scalar_select %p88, %s89, %s90
    %p94 = pneg %p88
    %p95 = scmp.eq.s32.totalorder %s11, 1
    %p96 = por %p94, %p95
    %p97 = scmp.ne.s32.totalorder %s89, %s92
    %p98 = scmp.eq.s32.totalorder %s11, 0
    %p99 = por %p97, %p98
    %p100 = scmp.ne.s32.totalorder %s89, %s92
    %p101 = scmp.eq.s32.totalorder %s16, 1
    %p102 = por %p100, %p101
    %p103 = scmp.ne.s32.totalorder %s92, %s93
    %p104 = scmp.eq.s32.totalorder %s16, 0
    %p105 = por %p103, %p104
    %p106 = scmp.ne.s32.totalorder %s92, %s93
    %p107 = scmp.eq.s32.totalorder %s17, 1
    %p108 = por %p106, %p107
    %p110 = scmp.ne.s32.totalorder %s93, %s109
    %p111 = scmp.eq.s32.totalorder %s17, 0
    %p112 = por %p110, %p111
    %s113 = ssub.s32 %s18, %s30
    %s114 = ssub.s32 %s19, %s26
    %s115 = sor.u32 %s113, %s114
    %p116 = scmp.eq.s32.totalorder %s115, 0
    %s118 = sadd.s32 %s117, 1
    %s119 = scalar_select %p116, %s117, %s118
    %p122 = pneg %p116
    %p123 = scmp.eq.s32.totalorder %s11, 1
    %p124 = por %p122, %p123
    %p125 = scmp.ne.s32.totalorder %s117, %s120
    %p126 = scmp.eq.s32.totalorder %s11, 0
    %p127 = por %p125, %p126
    %p128 = scmp.ne.s32.totalorder %s117, %s120
    %p129 = scmp.eq.s32.totalorder %s16, 1
    %p130 = por %p128, %p129
    %p131 = scmp.ne.s32.totalorder %s120, %s121
    %p132 = scmp.eq.s32.totalorder %s16, 0
    %p133 = por %p131, %p132
    %p134 = scmp.ne.s32.totalorder %s120, %s121
    %p135 = scmp.eq.s32.totalorder %s17, 1
    %p136 = por %p134, %p135
    %p138 = scmp.ne.s32.totalorder %s121, %s137
    %p139 = scmp.eq.s32.totalorder %s17, 0
    %p140 = por %p138, %p139
    %s141 = ssub.s32 %s18, %s30
    %s142 = ssub.s32 %s19, %s26
    %s143 = sor.u32 %s141, %s142
    %p144 = scmp.eq.s32.totalorder %s143, 0
    %s146 = sadd.s32 %s145, 1
    %s147 = scalar_select %p144, %s145, %s146
    %p150 = pneg %p144
    %p151 = scmp.eq.s32.totalorder %s11, 1
    %p152 = por %p150, %p151
    %p153 = scmp.ne.s32.totalorder %s145, %s148
    %p154 = scmp.eq.s32.totalorder %s11, 0
    %p155 = por %p153, %p154
    %p156 = scmp.ne.s32.totalorder %s145, %s148
    %p157 = scmp.eq.s32.totalorder %s16, 1
    %p158 = por %p156, %p157
    %p159 = scmp.ne.s32.totalorder %s148, %s149
    %p160 = scmp.eq.s32.totalorder %s16, 0
    %p161 = por %p159, %p160
    %p162 = scmp.ne.s32.totalorder %s148, %s149
    %p163 = scmp.eq.s32.totalorder %s17, 1
    %p164 = por %p162, %p163
    %p166 = scmp.ne.s32.totalorder %s149, %s165
    %p167 = scmp.eq.s32.totalorder %s17, 0
    %p168 = por %p166, %p167
    %s169 = ssub.s32 %s18, %s30
    %s170 = ssub.s32 %s19, %s26
    %s171 = sor.u32 %s169, %s170
    %p172 = scmp.eq.s32.totalorder %s171, 0
    %s174 = sadd.s32 %s173, 1
    %s175 = scalar_select %p172, %s173, %s174
    %p178 = pneg %p172
    %p179 = scmp.eq.s32.totalorder %s11, 1
    %p180 = por %p178, %p179
    %p181 = scmp.ne.s32.totalorder %s173, %s176
    %p182 = scmp.eq.s32.totalorder %s11, 0
    %p183 = por %p181, %p182
    %p184 = scmp.ne.s32.totalorder %s173, %s176
    %p185 = scmp.eq.s32.totalorder %s16, 1
    %p186 = por %p184, %p185
    %p187 = scmp.ne.s32.totalorder %s176, %s177
    %p188 = scmp.eq.s32.totalorder %s16, 0
    %p189 = por %p187, %p188
    %p190 = scmp.ne.s32.totalorder %s176, %s177
    %p191 = scmp.eq.s32.totalorder %s17, 1
    %p192 = por %p190, %p191
    %p194 = scmp.ne.s32.totalorder %s177, %s193
    %p195 = scmp.eq.s32.totalorder %s17, 0
    %p196 = por %p194, %p195
    %p197 = scmp.le.s32.totalorder 1, %s11
    %p198 = scmp.lt.s32.totalorder %s11, 3
    %p199 = pnand %p197, %p198
    %p200 = pneg %p199
    // Predicated region
    $region9: #{tpu_custom_call.1} parent=5 // pred_check
      _
    $region10: #{tpu_custom_call.1} parent=5 // pred_check_branch
      %202 = sbr.rel (%p199) target = $region12
    $region11: #{tpu_custom_call.1} parent=5 // pred_region
      %s203 = ssub.s32 %s11, 1
    $region12: #{tpu_custom_call.1} parent=5 // pred_fallthru
      _
    %p204 = scmp.lt.s32.totalorder %s11, 2
    // Predicated region
    $region13: #{tpu_custom_call.1} parent=5 // pred_check
      %p205 = pneg %p204
    $region14: #{tpu_custom_call.1} parent=5 // pred_check_branch
      %207 = sbr.rel (%p205) target = $region16
    $region15: #{tpu_custom_call.1} parent=5 // pred_region
      // Predicated region
      $region17: #{tpu_custom_call.1} parent=15 // pred_check
        %p208 = pneg %p45
      $region18: #{tpu_custom_call.1} parent=15 // pred_check_branch
        %210 = sbr.rel (%p208) target = $region20
      $region19: #{tpu_custom_call.1} parent=15 // pred_region
        %p211 = scmp.lt.s32.totalorder %s18, 1
        %s212 = scalar_select %p211, %s18, 1
        %p213 = scmp.lt.s32.totalorder %s19, 0
        %s214 = scalar_select %p213, %s19, 0
        %s215 = sadd.s32 %s214, %s212
        %s216 = smul.addr %s215, 8
        %s217 = scalar_lea.vmem %s0, %s216
      $region20: #{tpu_custom_call.1} parent=15 // pred_fallthru
        _
      // Predicated region
      $region21: #{tpu_custom_call.1} parent=15 // pred_check
        %p218 = pneg %p71
      $region22: #{tpu_custom_call.1} parent=15 // pred_check_branch
        %220 = sbr.rel (%p218) target = $region24
      $region23: #{tpu_custom_call.1} parent=15 // pred_region
        %p221 = scmp.lt.s32.totalorder %s18, 1
        %s222 = scalar_select %p221, %s18, 1
        %s223 = smul.addr %s222, 4
        %s224 = scalar_lea.vmem %s1, %s223
      $region24: #{tpu_custom_call.1} parent=15 // pred_fallthru
        _
      // Predicated region
      $region25: #{tpu_custom_call.1} parent=15 // pred_check
        %p225 = pneg %p99
      $region26: #{tpu_custom_call.1} parent=15 // pred_check_branch
        %227 = sbr.rel (%p225) target = $region28
      $region27: #{tpu_custom_call.1} parent=15 // pred_region
        %p228 = scmp.lt.s32.totalorder %s18, 1
        %s229 = scalar_select %p228, %s18, 1
        %p230 = scmp.lt.s32.totalorder %s19, 0
        %s231 = scalar_select %p230, %s19, 0
        %s232 = sadd.s32 %s231, %s229
        %s233 = smul.addr %s232, 8
        %s234 = scalar_lea.vmem %s2, %s233
      $region28: #{tpu_custom_call.1} parent=15 // pred_fallthru
        _
      // Predicated region
      $region29: #{tpu_custom_call.1} parent=15 // pred_check
        %p235 = pneg %p127
      $region30: #{tpu_custom_call.1} parent=15 // pred_check_branch
        %237 = sbr.rel (%p235) target = $region32
      $region31: #{tpu_custom_call.1} parent=15 // pred_region
        %p238 = scmp.lt.s32.totalorder %s18, 1
        %s239 = scalar_select %p238, %s18, 1
        %p240 = scmp.lt.s32.totalorder %s19, 0
        %s241 = scalar_select %p240, %s19, 0
        %s242 = sadd.s32 %s241, %s239
        %s243 = smul.addr %s242, 8
        %s244 = scalar_lea.vmem %s3, %s243
      $region32: #{tpu_custom_call.1} parent=15 // pred_fallthru
        _
      // Predicated region
      $region33: #{tpu_custom_call.1} parent=15 // pred_check
        %p245 = pneg %p155
      $region34: #{tpu_custom_call.1} parent=15 // pred_check_branch
        %247 = sbr.rel (%p245) target = $region36
      $region35: #{tpu_custom_call.1} parent=15 // pred_region
        %p248 = scmp.lt.s32.totalorder %s18, 1
        %s249 = scalar_select %p248, %s18, 1
        %p250 = scmp.lt.s32.totalorder %s19, 0
        %s251 = scalar_select %p250, %s19, 0
        %s252 = sadd.s32 %s251, %s249
        %s253 = smul.addr %s252, 8
        %s254 = scalar_lea.vmem %s4, %s253
      $region36: #{tpu_custom_call.1} parent=15 // pred_fallthru
        _
    $region16: #{tpu_custom_call.1} parent=5 // pred_fallthru
      _
    %p255 = scmp.le.s32.totalorder 1, %s11
    %p256 = scmp.lt.s32.totalorder %s11, 3
    %p257 = pnand %p255, %p256
    %p258 = pneg %p257
    // Predicated region
    $region37: #{tpu_custom_call.1} parent=5 // pred_check
      _
    $region38: #{tpu_custom_call.1} parent=5 // pred_check_branch
      %260 = sbr.rel (%p257) target = $region40
    $region39: #{tpu_custom_call.1} parent=5 // pred_region
      %s261 = ssub.s32 %s11, 1
      %p262 = scmp.lt.s32.totalorder %s20, 1
      %s263 = scalar_select %p262, %s20, 1
      %p264 = scmp.lt.s32.totalorder %s21, 0
      %s265 = scalar_select %p264, %s21, 0
      %s266 = sadd.s32 %s265, %s263
      %s267 = smul.addr %s266, 8
      %s268 = scalar_lea.vmem %s0, %s267
      %p269 = pneg %p51
      %p270 = pneg %p48
      %p271 = scmp.lt.s32.totalorder %s20, 1
      %s272 = scalar_select %p271, %s20, 1
      %s273 = smul.addr %s272, 4
      %s274 = scalar_lea.vmem %s1, %s273
      %p275 = pneg %p77
      %p276 = pneg %p74
      %p277 = scmp.lt.s32.totalorder %s20, 1
      %s278 = scalar_select %p277, %s20, 1
      %p279 = scmp.lt.s32.totalorder %s21, 0
      %s280 = scalar_select %p279, %s21, 0
      %s281 = sadd.s32 %s280, %s278
      %s282 = smul.addr %s281, 8
      %s283 = scalar_lea.vmem %s2, %s282
      %p284 = pneg %p105
      %p285 = pneg %p102
      %p286 = scmp.lt.s32.totalorder %s20, 1
      %s287 = scalar_select %p286, %s20, 1
      %p288 = scmp.lt.s32.totalorder %s21, 0
      %s289 = scalar_select %p288, %s21, 0
      %s290 = sadd.s32 %s289, %s287
      %s291 = smul.addr %s290, 8
      %s292 = scalar_lea.vmem %s3, %s291
      %p293 = pneg %p133
      %p294 = pneg %p130
      %p295 = scmp.lt.s32.totalorder %s20, 1
      %s296 = scalar_select %p295, %s20, 1
      %p297 = scmp.lt.s32.totalorder %s21, 0
      %s298 = scalar_select %p297, %s21, 0
      %s299 = sadd.s32 %s298, %s296
      %s300 = smul.addr %s299, 8
      %s301 = scalar_lea.vmem %s4, %s300
      %p302 = pneg %p161
      %p303 = pneg %p158
      %p304 = pneg %p189
      %p305 = pneg %p186
      %p306 = scmp.lt.s32.totalorder %s20, 1
      %s307 = scalar_select %p306, %s20, 1
      %p308 = scmp.lt.s32.totalorder %s21, 0
      %s309 = scalar_select %p308, %s21, 0
      %s310 = sadd.s32 %s309, %s307
      %s311 = smul.addr %s310, 8
      %s312 = scalar_lea.vmem %s5, %s311
      %p313 = scmp.lt.s32.totalorder %s20, 1
      %s314 = scalar_select %p313, %s20, 1
      %p315 = scmp.lt.s32.totalorder %s21, 0
      %s316 = scalar_select %p315, %s21, 0
      %s317 = sadd.s32 %s316, %s314
      %s318 = smul.addr %s317, 8
      %s319 = scalar_lea.vmem %s0, %s318
      %p320 = scmp.lt.s32.totalorder %s20, 1
      %s321 = scalar_select %p320, %s20, 1
      %s322 = smul.addr %s321, 4
      %s323 = scalar_lea.vmem %s1, %s322
      %p324 = scmp.lt.s32.totalorder %s20, 1
      %s325 = scalar_select %p324, %s20, 1
      %p326 = scmp.lt.s32.totalorder %s21, 0
      %s327 = scalar_select %p326, %s21, 0
      %s328 = sadd.s32 %s327, %s325
      %s329 = smul.addr %s328, 8
      %s330 = scalar_lea.vmem %s2, %s329
      %p331 = scmp.lt.s32.totalorder %s20, 1
      %s332 = scalar_select %p331, %s20, 1
      %p333 = scmp.lt.s32.totalorder %s21, 0
      %s334 = scalar_select %p333, %s21, 0
      %s335 = sadd.s32 %s334, %s332
      %s336 = smul.addr %s335, 8
      %s337 = scalar_lea.vmem %s3, %s336
      %p338 = scmp.lt.s32.totalorder %s20, 1
      %s339 = scalar_select %p338, %s20, 1
      %p340 = scmp.lt.s32.totalorder %s21, 0
      %s341 = scalar_select %p340, %s21, 0
      %s342 = sadd.s32 %s341, %s339
      %s343 = smul.addr %s342, 8
      %s344 = scalar_lea.vmem %s4, %s343
      %p345 = scmp.lt.s32.totalorder %s20, 1
      %s346 = scalar_select %p345, %s20, 1
      %p347 = scmp.lt.s32.totalorder %s21, 0
      %s348 = scalar_select %p347, %s21, 0
      %s349 = sadd.s32 %s348, %s346
      %s350 = smul.addr %s349, 8
      %s351 = scalar_lea.vmem %s5, %s350
      %v352 = vld [vmem:[%s319] sm:$0xff]
      %v353 = vld [vmem:[%s323] sm:$0x7]
      %v354 = vld [vmem:[%s330] sm:$0xff]
      %v355 = vld [vmem:[%s337] sm:$0xff]
      %v356 = vld [vmem:[%s344] sm:$0xff]
      %358 = vset.pattern.permute.xlu0 0
      %359 = vperm.xlu0 %358, %v352
      %v360 = vpop.permute.xlu0 %359
      %v362 = vperm.slane %v353, 0
      %v363 = vsub.f32 %v360, %v362
      %364 = vset.pattern.permute.xlu0 1
      %365 = vperm.xlu0 %364, %v352
      %v366 = vpop.permute.xlu0 %365
      %v368 = vperm.slane %v353, 1
      %v369 = vsub.f32 %v366, %v368
      %370 = vset.pattern.permute.xlu0 2
      %371 = vperm.xlu0 %370, %v352
      %v372 = vpop.permute.xlu0 %371
      %v374 = vperm.slane %v353, 2
      %v375 = vsub.f32 %v372, %v374
      %v376 = vmul.f32 %v363, %v363
      %v377 = vmul.f32 %v369, %v369
      %v378 = vadd.f32 %v376, %v377
      %v379 = vmul.f32 %v375, %v375
      %v380 = vadd.f32 %v378, %v379
      %v381 = vrsqrt.pop %v380
      %v382 = vmul.f32 %v381, %v380
      %v383 = vmul.f32 %v382, %v381
      %v384 = vmul.f32 0.5, %v383
      %v385 = vsub.f32 1.5, %v384
      %v386 = vmul.f32 %v381, %v385
      %vm387 = vweird.f32 %v380
      %vm388 = vweird.f32 %v381
      %vm389 = vmor %vm387, %vm388
      %v390 = vsel %vm389, %v381, %v386
      %v391 = vmin.f32 %v390, 1e+08
      %v392 = vmul.f32 %v354, %v355
      %v393 = vmul.f32 %v392, %v391
      %vm394 = vcmask 64512
      %v395 = vsel %vm394, %v355, 0.0
      %396 = vadd.xlane.f32.xlu0 %v395
      %v397 = vpop.xlane.xlu0 %396
      %v398 = vadd.f32 %v397, 1e-07
      %v399 = vmul.f32 %v393, %v363
      %v400 = vsel %vm394, %v399, 0.0
      %401 = vadd.xlane.f32.xlu0 %v400
      %v402 = vpop.xlane.xlu0 %401
      %v403 = vmul.f32 %v393, %v369
      %v404 = vsel %vm394, %v403, 0.0
      %405 = vadd.xlane.f32.xlu0 %v404
      %v406 = vpop.xlane.xlu0 %405
      %v407 = vmul.f32 %v393, %v375
      %v408 = vsel %vm394, %v407, 0.0
      %409 = vadd.xlane.f32.xlu0 %v408
      %v410 = vpop.xlane.xlu0 %409
      %vm411 = vcmask 7168
      %v412 = vsel %vm411, %v402, %v406
      %vm413 = vcmask 15360
      %v414 = vsel %vm413, %v412, %v410
      %v415 = vrcp.pop %v398
      %v416 = vmul.f32 %v398, %v415
      %v417 = vsub.f32 1.0, %v416
      %v418 = vmul.f32 %v415, %v417
      %v419 = vadd.f32 %v415, %v418
      %vm420 = vweird.f32 %v398
      %vm421 = vweird.f32 %v415
      %vm422 = vmor %vm420, %vm421
      %v423 = vsel %vm422, %v415, %v419
      %v424 = vand.u32 2147483647, %v398
      %vm425 = vcmp.eq.f32.partialorder %v424, 8.507059e+37
      %v426 = vand.u32 %v398, 2147483648
      %v427 = vor.u32 1.1754944e-38, %v426
      %v428 = vsel %vm425, %v427, %v423
      %v429 = vmul.f32 %v414, %v428
      %431 = vset.pattern.permute.xlu0 0
      %432 = vperm.xlu0 %431, %v356
      %v433 = vpop.permute.xlu0 %432
      %v435 = vmul.f32 %v429, %v433
      %vm436 = vcmask 23552
      %437 = vst.msk [vmem:[%s351] sm:$0xff] %vm436, %v435
      %p438 = scmp.lt.s32.totalorder %s20, 1
      %s439 = scalar_select %p438, %s20, 1
      %p440 = scmp.lt.s32.totalorder %s21, 0
      %s441 = scalar_select %p440, %s21, 0
      %s442 = sadd.s32 %s441, %s439
      %s443 = smul.addr %s442, 8
      %s444 = scalar_lea.vmem %s5, %s443
      // Predicated region
      $region41: #{tpu_custom_call.1} parent=39 // pred_check
        %p445 = pneg %p186
      $region42: #{tpu_custom_call.1} parent=39 // pred_check_branch
        %447 = sbr.rel (%p445) target = $region44
      $region43: #{tpu_custom_call.1} parent=39 // pred_region
        _
      $region44: #{tpu_custom_call.1} parent=39 // pred_fallthru
        _
    $region40: #{tpu_custom_call.1} parent=5 // pred_fallthru
      _
    %p448 = scmp.le.s32.totalorder 2, %s11
    // Predicated region
    $region45: #{tpu_custom_call.1} parent=5 // pred_check
      %p449 = pneg %p448
    $region46: #{tpu_custom_call.1} parent=5 // pred_check_branch
      %451 = sbr.rel (%p449) target = $region48
    $region47: #{tpu_custom_call.1} parent=5 // pred_region
      %s452 = ssub.s32 %s11, 2
      // Predicated region
      $region49: #{tpu_custom_call.1} parent=47 // pred_check
        %p453 = pneg %p192
      $region50: #{tpu_custom_call.1} parent=47 // pred_check_branch
        %455 = sbr.rel (%p453) target = $region52
      $region51: #{tpu_custom_call.1} parent=47 // pred_region
        %p456 = scmp.lt.s32.totalorder %s22, 1
        %s457 = scalar_select %p456, %s22, 1
        %p458 = scmp.lt.s32.totalorder %s23, 0
        %s459 = scalar_select %p458, %s23, 0
        %s460 = sadd.s32 %s459, %s457
        %s461 = smul.addr %s460, 8
        %s462 = scalar_lea.vmem %s5, %s461
      $region52: #{tpu_custom_call.1} parent=47 // pred_fallthru
        _
    $region48: #{tpu_custom_call.1} parent=5 // pred_fallthru
      _
  $region6: #{tpu_custom_call.1} parent=0 // loop_footer
    %s15 = sadd.s32 1, %s11
  $region7: #{tpu_custom_call.1} parent=0 // loop_footer_branch
    %10 = sbr.rel target = $region3
  $region8: #{tpu_custom_call.1} parent=0 // loop_exit
    _

</llo_original>
